<compile_context>
chip_gen: v5e
topology: v5e:2x2
jax: 0.10.0
libtpu: 0.0.40
codegen_flags: <defaults>
</compile_context>

<pallas_src>
import functools

import jax
import jax.numpy as jnp
import numpy as np
from jax.experimental import pallas as pl
from jax.experimental.pallas import tpu as pltpu

LEAKY_SLOPE = 0.2   # nn.LeakyReLU(0.2)
RES_SCALE = 0.1     # out = 0.1 * out + residual


def _res_conv_kernel(x_ref, m1_ref, b1_ref, m2_ref, b2_ref, out_ref, pad_ref,
                     *, row_off, col_off, kh_taps):
    """One batch element per grid step, lane-dense [H, W*C] layout.

    x_ref   : [H, W*C]         unpadded input block (residual source too)
    m1/m2   : [KH, Wp*C, W*C]  banded conv weights (kw + cin folded into K)
    b1/b2   : [1, W*C]         biases tiled over width
    out_ref : [H, W*C]
    pad_ref : VMEM scratch [H+2p, Wp*C]; zero-padded staging buffer shared by
              conv1 input (x) and conv2 input (conv1 output).
    """
    H, WC = x_ref.shape
    Hp, WpC = pad_ref.shape

    # Zero only the padding halo; the interior is fully overwritten below.
    # (Done every grid step so it is correct regardless of per-core scratch.)
    if row_off:
        pad_ref[0:row_off, :] = jnp.zeros((row_off, WpC), jnp.float32)
        pad_ref[row_off + H:, :] = jnp.zeros((Hp - row_off - H, WpC), jnp.float32)
    if col_off:
        pad_ref[:, 0:col_off] = jnp.zeros((Hp, col_off), jnp.float32)
        pad_ref[:, col_off + WC:] = jnp.zeros((Hp, WpC - col_off - WC), jnp.float32)

    # ---------------- conv1 + bias + LeakyReLU(0.2) ----------------
    pad_ref[row_off:row_off + H, col_off:col_off + WC] = \
        x_ref[...].astype(jnp.float32)

    acc = jnp.zeros((H, WC), jnp.float32)
    for kh in range(kh_taps):                         # static, unrolled (KH=3)
        acc += jnp.dot(pad_ref[kh:kh + H, :], m1_ref[kh],
                       preferred_element_type=jnp.float32)
    acc += b1_ref[...]
    y = jnp.where(acc > 0, acc, LEAKY_SLOPE * acc)    # LeakyReLU(0.2), f32 VPU

    # ---------------- conv2 + bias, then residual add ----------------
    pad_ref[row_off:row_off + H, col_off:col_off + WC] = y

    acc2 = jnp.zeros((H, WC), jnp.float32)
    for kh in range(kh_taps):
        acc2 += jnp.dot(pad_ref[kh:kh + H, :], m2_ref[kh],
                        preferred_element_type=jnp.float32)
    acc2 += b2_ref[...]

    out_ref[...] = (RES_SCALE * acc2
                    + x_ref[...].astype(jnp.float32)).astype(out_ref.dtype)


def _banded_weights(w_hwio, W, pad):
    """[KH,KW,Cin,Cout] HWIO -> [KH, (W+2p)*Cin, W*Cout] banded matrices.

    M[kh, w'*Cin + ci, w*Cout + co] = w[kh, w'-w, ci, co] if 0 <= w'-w < KW
    so conv over (kw, cin) becomes one matmul per kh on [H, Wp*Cin] rows.
    """
    KH, KW, Cin, Cout = w_hwio.shape
    Wp = W + 2 * pad
    wprime = jnp.arange(Wp)[:, None]            # [Wp, 1]
    wcol = jnp.arange(W)[None, :]               # [1, W]
    kw_idx = wprime - wcol                      # [Wp, W]
    valid = (kw_idx >= 0) & (kw_idx < KW)
    kw_clamped = jnp.clip(kw_idx, 0, KW - 1)
    T = w_hwio[:, kw_clamped]                   # [KH, Wp, W, Cin, Cout]
    T = jnp.where(valid[None, :, :, None, None], T, jnp.zeros((), w_hwio.dtype))
    T = jnp.transpose(T, (0, 1, 3, 2, 4))       # [KH, Wp, Cin, W, Cout]
    return T.reshape(KH, Wp * Cin, W * Cout)


def res_conv2d_layer(x_nchw, w1, b1, w2, b2):
    """x_nchw: [B, C, H, W] float32 (PyTorch convention). Returns NCHW."""
    x = jnp.transpose(x_nchw, (0, 2, 3, 1))     # -> NHWC
    B, H, W, C = x.shape
    KH, KW = w1.shape[0], w1.shape[1]
    pad = (KH - 1) // 2
    Wp = W + 2 * pad
    WC = W * C

    x_flat = x.reshape(B, H, WC)                # lane-dense, contiguous reshape
    m1 = _banded_weights(w1, W, pad)            # [KH, Wp*C, W*C]
    m2 = _banded_weights(w2, W, pad)
    b1w = jnp.tile(b1, W).reshape(1, WC)
    b2w = jnp.tile(b2, W).reshape(1, WC)

    kernel = functools.partial(_res_conv_kernel,
                               row_off=pad, col_off=pad * C, kh_taps=KH)

    flops = 2 * 2 * B * H * W * KH * KW * C * C          # two convs, MACs*2
    bytes_accessed = (2 * B * H * WC + m1.size + m2.size + 2 * WC) * 4
    cost = pl.CostEstimate(flops=flops, transcendentals=0,
                           bytes_accessed=bytes_accessed)

    out = pl.pallas_call(
        kernel,
        out_shape=jax.ShapeDtypeStruct((B, H, WC), x.dtype),
        grid_spec=pltpu.PrefetchScalarGridSpec(
            num_scalar_prefetch=0,
            grid=(B,),
            in_specs=[
                pl.BlockSpec((None, H, WC), lambda b: (b, 0, 0)),      # x
                pl.BlockSpec((KH, Wp * C, WC), lambda b: (0, 0, 0)),   # m1
                pl.BlockSpec((1, WC), lambda b: (0, 0)),               # b1
                pl.BlockSpec((KH, Wp * C, WC), lambda b: (0, 0, 0)),   # m2
                pl.BlockSpec((1, WC), lambda b: (0, 0)),               # b2
            ],
            out_specs=pl.BlockSpec((None, H, WC), lambda b: (b, 0, 0)),
            scratch_shapes=[pltpu.VMEM((H + 2 * pad, Wp * C), jnp.float32)],
        ),
        compiler_params=pltpu.CompilerParams(
            dimension_semantics=("parallel",),
            vmem_limit_bytes=32 * 1024 * 1024),
        cost_estimate=cost,
    )(x_flat, m1, b1w, m2, b2w)

    out = out.reshape(B, H, W, C)
    return jnp.transpose(out, (0, 3, 1, 2))     # -> NCHW


def _reference(x_nchw, w1, b1, w2, b2):
    """Pure-JAX reference matching the PyTorch forward."""
    x = jnp.transpose(x_nchw, (0, 2, 3, 1))
    dn = ('NHWC', 'HWIO', 'NHWC')
    y = jax.lax.conv_general_dilated(x, w1, (1, 1), ((1, 1), (1, 1)),
                                     dimension_numbers=dn) + b1.reshape(1, 1, 1, -1)
    y = jnp.where(y > 0, y, LEAKY_SLOPE * y)
    y2 = jax.lax.conv_general_dilated(y, w2, (1, 1), ((1, 1), (1, 1)),
                                      dimension_numbers=dn) + b2.reshape(1, 1, 1, -1)
    out = RES_SCALE * y2 + x
    return jnp.transpose(out, (0, 3, 1, 2))


if __name__ == "__main__":
    B, C, H, W = 2, 8, 16, 16
    KH = KW = 3

    key = jax.random.PRNGKey(0)
    kx, kw1, kb1, kw2, kb2 = jax.random.split(key, 5)

    x = jax.random.normal(kx, (B, C, H, W), jnp.float32)
    # deterministic synthetic parameters (Conv2d(in=C, out=C, k=3) x2), HWIO
    w1 = 0.1 * jax.random.normal(kw1, (KH, KW, C, C), jnp.float32)
    b1 = 0.1 * jax.random.normal(kb1, (C,), jnp.float32)
    w2 = 0.1 * jax.random.normal(kw2, (KH, KW, C, C), jnp.float32)
    b2 = 0.1 * jax.random.normal(kb2, (C,), jnp.float32)

    out = jax.block_until_ready(res_conv2d_layer(x, w1, b1, w2, b2))
    ref = jax.block_until_ready(_reference(x, w1, b1, w2, b2))

    np.testing.assert_allclose(np.asarray(out), np.asarray(ref),
                               rtol=1e-5, atol=1e-5)
    print("KERNEL_OK")
</pallas_src>

<mosaic_0001>
module attributes {stable_mosaic.version = 11 : i64} {
  func.func @_res_conv_kernel(%arg0: i32, %arg1: memref<1x16x128xf32, #tpu.memory_space<vmem>>, %arg2: memref<3x144x128xf32, #tpu.memory_space<vmem>>, %arg3: memref<1x128xf32, #tpu.memory_space<vmem>>, %arg4: memref<3x144x128xf32, #tpu.memory_space<vmem>>, %arg5: memref<1x128xf32, #tpu.memory_space<vmem>>, %arg6: memref<1x16x128xf32, #tpu.memory_space<vmem>>, %arg7: memref<18x144xf32, #tpu.memory_space<vmem>>) attributes {dimension_semantics = [#tpu.dimension_semantics<parallel>], iteration_bounds = array<i64: 2>, scalar_prefetch = 0 : i64, scratch_operands = 1 : i64, tpu.core_type = #tpu.core_type<tc>, window_params = [{transform_indices = @transform_0, window_bounds = array<i64: 1, 16, 128>}, {pipeline_mode = #tpu.pipeline_mode<synchronous>, transform_indices = @transform_1, window_bounds = array<i64: 3, 144, 128>}, {pipeline_mode = #tpu.pipeline_mode<synchronous>, transform_indices = @transform_2, window_bounds = array<i64: 1, 128>}, {pipeline_mode = #tpu.pipeline_mode<synchronous>, transform_indices = @transform_3, window_bounds = array<i64: 3, 144, 128>}, {pipeline_mode = #tpu.pipeline_mode<synchronous>, transform_indices = @transform_4, window_bounds = array<i64: 1, 128>}, {transform_indices = @transform_5, window_bounds = array<i64: 1, 16, 128>}]} {
    %cst = arith.constant 0.000000e+00 : f32
    %0 = vector.broadcast %cst : f32 to vector<1x144xf32>
    %c0 = arith.constant 0 : index
    %c0_0 = arith.constant 0 : index
    %1 = vector.load %arg7[%c0, %c0_0] : memref<18x144xf32, #tpu.memory_space<vmem>>, vector<1x144xf32>
    tpu.vector_store %arg7[%c0, %c0_0], %0 {strides = array<i32>} : memref<18x144xf32, #tpu.memory_space<vmem>>, vector<1x144xf32>,
    %cst_1 = arith.constant 0.000000e+00 : f32
    %2 = vector.broadcast %cst_1 : f32 to vector<1x144xf32>
    %c17 = arith.constant 17 : index
    %c0_2 = arith.constant 0 : index
    %3 = vector.load %arg7[%c17, %c0_2] : memref<18x144xf32, #tpu.memory_space<vmem>>, vector<1x144xf32>
    tpu.vector_store %arg7[%c17, %c0_2], %2 {strides = array<i32>} : memref<18x144xf32, #tpu.memory_space<vmem>>, vector<1x144xf32>,
    %cst_3 = arith.constant 0.000000e+00 : f32
    %4 = vector.broadcast %cst_3 : f32 to vector<18x8xf32>
    %c0_4 = arith.constant 0 : index
    %c0_5 = arith.constant 0 : index
    %5 = vector.load %arg7[%c0_4, %c0_5] : memref<18x144xf32, #tpu.memory_space<vmem>>, vector<18x8xf32>
    tpu.vector_store %arg7[%c0_4, %c0_5], %4 {strides = array<i32>} : memref<18x144xf32, #tpu.memory_space<vmem>>, vector<18x8xf32>,
    %cst_6 = arith.constant 0.000000e+00 : f32
    %6 = vector.broadcast %cst_6 : f32 to vector<18x8xf32>
    %c0_7 = arith.constant 0 : index
    %c136 = arith.constant 136 : index
    %7 = vector.load %arg7[%c0_7, %c136] : memref<18x144xf32, #tpu.memory_space<vmem>>, vector<18x8xf32>
    tpu.vector_store %arg7[%c0_7, %c136], %6 {strides = array<i32>} : memref<18x144xf32, #tpu.memory_space<vmem>>, vector<18x8xf32>,
    %c0_8 = arith.constant 0 : index
    %c0_9 = arith.constant 0 : index
    %c0_10 = arith.constant 0 : index
    %8 = vector.load %arg1[%c0_8, %c0_9, %c0_10] : memref<1x16x128xf32, #tpu.memory_space<vmem>>, vector<1x16x128xf32>
    %9 = vector.shape_cast %8 : vector<1x16x128xf32> to vector<16x128xf32>
    %c1 = arith.constant 1 : index
    %c8 = arith.constant 8 : index
    %10 = vector.load %arg7[%c1, %c8] : memref<18x144xf32, #tpu.memory_space<vmem>>, vector<16x128xf32>
    tpu.vector_store %arg7[%c1, %c8], %9 {strides = array<i32>} : memref<18x144xf32, #tpu.memory_space<vmem>>, vector<16x128xf32>,
    %cst_11 = arith.constant 0.000000e+00 : f32
    %11 = vector.broadcast %cst_11 : f32 to vector<16x128xf32>
    %c0_12 = arith.constant 0 : index
    %c0_13 = arith.constant 0 : index
    %12 = vector.load %arg7[%c0_12, %c0_13] : memref<18x144xf32, #tpu.memory_space<vmem>>, vector<16x144xf32>
    %c0_14 = arith.constant 0 : index
    %c0_15 = arith.constant 0 : index
    %c0_16 = arith.constant 0 : index
    %13 = vector.load %arg2[%c0_14, %c0_15, %c0_16] : memref<3x144x128xf32, #tpu.memory_space<vmem>>, vector<1x144x128xf32>
    %14 = vector.shape_cast %13 : vector<1x144x128xf32> to vector<144x128xf32>
    %cst_17 = arith.constant dense<0.000000e+00> : vector<16x128xf32>
    %15 = tpu.matmul %12, %14, %cst_17 {dimension_numbers = #tpu.dot_dimension_numbers<[1], [0], [0], [1], [0, 0, 1, 1], [], []>} : vector<16x144xf32>, vector<144x128xf32>, vector<16x128xf32> -> vector<16x128xf32>
    %16 = arith.addf %11, %15 : vector<16x128xf32>
    %c1_18 = arith.constant 1 : index
    %c0_19 = arith.constant 0 : index
    %17 = vector.load %arg7[%c1_18, %c0_19] : memref<18x144xf32, #tpu.memory_space<vmem>>, vector<16x144xf32>
    %c1_20 = arith.constant 1 : index
    %c0_21 = arith.constant 0 : index
    %c0_22 = arith.constant 0 : index
    %18 = vector.load %arg2[%c1_20, %c0_21, %c0_22] : memref<3x144x128xf32, #tpu.memory_space<vmem>>, vector<1x144x128xf32>
    %19 = vector.shape_cast %18 : vector<1x144x128xf32> to vector<144x128xf32>
    %cst_23 = arith.constant dense<0.000000e+00> : vector<16x128xf32>
    %20 = tpu.matmul %17, %19, %cst_23 {dimension_numbers = #tpu.dot_dimension_numbers<[1], [0], [0], [1], [0, 0, 1, 1], [], []>} : vector<16x144xf32>, vector<144x128xf32>, vector<16x128xf32> -> vector<16x128xf32>
    %21 = arith.addf %16, %20 : vector<16x128xf32>
    %c2 = arith.constant 2 : index
    %c0_24 = arith.constant 0 : index
    %22 = vector.load %arg7[%c2, %c0_24] : memref<18x144xf32, #tpu.memory_space<vmem>>, vector<16x144xf32>
    %c2_25 = arith.constant 2 : index
    %c0_26 = arith.constant 0 : index
    %c0_27 = arith.constant 0 : index
    %23 = vector.load %arg2[%c2_25, %c0_26, %c0_27] : memref<3x144x128xf32, #tpu.memory_space<vmem>>, vector<1x144x128xf32>
    %24 = vector.shape_cast %23 : vector<1x144x128xf32> to vector<144x128xf32>
    %cst_28 = arith.constant dense<0.000000e+00> : vector<16x128xf32>
    %25 = tpu.matmul %22, %24, %cst_28 {dimension_numbers = #tpu.dot_dimension_numbers<[1], [0], [0], [1], [0, 0, 1, 1], [], []>} : vector<16x144xf32>, vector<144x128xf32>, vector<16x128xf32> -> vector<16x128xf32>
    %26 = arith.addf %21, %25 : vector<16x128xf32>
    %c0_29 = arith.constant 0 : index
    %c0_30 = arith.constant 0 : index
    %27 = vector.load %arg3[%c0_29, %c0_30] : memref<1x128xf32, #tpu.memory_space<vmem>>, vector<1x128xf32>
    %28 = vector.broadcast %27 : vector<1x128xf32> to vector<16x128xf32>
    %29 = arith.addf %26, %28 : vector<16x128xf32>
    %cst_31 = arith.constant 0.000000e+00 : f32
    %30 = vector.broadcast %cst_31 : f32 to vector<16x128xf32>
    %31 = arith.cmpf ogt, %29, %30 : vector<16x128xf32>
    %cst_32 = arith.constant 2.000000e-01 : f32
    %32 = vector.broadcast %cst_32 : f32 to vector<16x128xf32>
    %33 = arith.mulf %32, %29 : vector<16x128xf32>
    %34 = arith.select %31, %29, %33 : vector<16x128xi1>, vector<16x128xf32>
    %c1_33 = arith.constant 1 : index
    %c8_34 = arith.constant 8 : index
    %35 = vector.load %arg7[%c1_33, %c8_34] : memref<18x144xf32, #tpu.memory_space<vmem>>, vector<16x128xf32>
    tpu.vector_store %arg7[%c1_33, %c8_34], %34 {strides = array<i32>} : memref<18x144xf32, #tpu.memory_space<vmem>>, vector<16x128xf32>,
    %cst_35 = arith.constant 0.000000e+00 : f32
    %36 = vector.broadcast %cst_35 : f32 to vector<16x128xf32>
    %c0_36 = arith.constant 0 : index
    %c0_37 = arith.constant 0 : index
    %37 = vector.load %arg7[%c0_36, %c0_37] : memref<18x144xf32, #tpu.memory_space<vmem>>, vector<16x144xf32>
    %c0_38 = arith.constant 0 : index
    %c0_39 = arith.constant 0 : index
    %c0_40 = arith.constant 0 : index
    %38 = vector.load %arg4[%c0_38, %c0_39, %c0_40] : memref<3x144x128xf32, #tpu.memory_space<vmem>>, vector<1x144x128xf32>
    %39 = vector.shape_cast %38 : vector<1x144x128xf32> to vector<144x128xf32>
    %cst_41 = arith.constant dense<0.000000e+00> : vector<16x128xf32>
    %40 = tpu.matmul %37, %39, %cst_41 {dimension_numbers = #tpu.dot_dimension_numbers<[1], [0], [0], [1], [0, 0, 1, 1], [], []>} : vector<16x144xf32>, vector<144x128xf32>, vector<16x128xf32> -> vector<16x128xf32>
    %41 = arith.addf %36, %40 : vector<16x128xf32>
    %c1_42 = arith.constant 1 : index
    %c0_43 = arith.constant 0 : index
    %42 = vector.load %arg7[%c1_42, %c0_43] : memref<18x144xf32, #tpu.memory_space<vmem>>, vector<16x144xf32>
    %c1_44 = arith.constant 1 : index
    %c0_45 = arith.constant 0 : index
    %c0_46 = arith.constant 0 : index
    %43 = vector.load %arg4[%c1_44, %c0_45, %c0_46] : memref<3x144x128xf32, #tpu.memory_space<vmem>>, vector<1x144x128xf32>
    %44 = vector.shape_cast %43 : vector<1x144x128xf32> to vector<144x128xf32>
    %cst_47 = arith.constant dense<0.000000e+00> : vector<16x128xf32>
    %45 = tpu.matmul %42, %44, %cst_47 {dimension_numbers = #tpu.dot_dimension_numbers<[1], [0], [0], [1], [0, 0, 1, 1], [], []>} : vector<16x144xf32>, vector<144x128xf32>, vector<16x128xf32> -> vector<16x128xf32>
    %46 = arith.addf %41, %45 : vector<16x128xf32>
    %c2_48 = arith.constant 2 : index
    %c0_49 = arith.constant 0 : index
    %47 = vector.load %arg7[%c2_48, %c0_49] : memref<18x144xf32, #tpu.memory_space<vmem>>, vector<16x144xf32>
    %c2_50 = arith.constant 2 : index
    %c0_51 = arith.constant 0 : index
    %c0_52 = arith.constant 0 : index
    %48 = vector.load %arg4[%c2_50, %c0_51, %c0_52] : memref<3x144x128xf32, #tpu.memory_space<vmem>>, vector<1x144x128xf32>
    %49 = vector.shape_cast %48 : vector<1x144x128xf32> to vector<144x128xf32>
    %cst_53 = arith.constant dense<0.000000e+00> : vector<16x128xf32>
    %50 = tpu.matmul %47, %49, %cst_53 {dimension_numbers = #tpu.dot_dimension_numbers<[1], [0], [0], [1], [0, 0, 1, 1], [], []>} : vector<16x144xf32>, vector<144x128xf32>, vector<16x128xf32> -> vector<16x128xf32>
    %51 = arith.addf %46, %50 : vector<16x128xf32>
    %c0_54 = arith.constant 0 : index
    %c0_55 = arith.constant 0 : index
    %52 = vector.load %arg5[%c0_54, %c0_55] : memref<1x128xf32, #tpu.memory_space<vmem>>, vector<1x128xf32>
    %53 = vector.broadcast %52 : vector<1x128xf32> to vector<16x128xf32>
    %54 = arith.addf %51, %53 : vector<16x128xf32>
    %cst_56 = arith.constant 1.000000e-01 : f32
    %55 = vector.broadcast %cst_56 : f32 to vector<16x128xf32>
    %56 = arith.mulf %55, %54 : vector<16x128xf32>
    %c0_57 = arith.constant 0 : index
    %c0_58 = arith.constant 0 : index
    %c0_59 = arith.constant 0 : index
    %57 = vector.load %arg1[%c0_57, %c0_58, %c0_59] : memref<1x16x128xf32, #tpu.memory_space<vmem>>, vector<1x16x128xf32>
    %58 = vector.shape_cast %57 : vector<1x16x128xf32> to vector<16x128xf32>
    %59 = arith.addf %56, %58 : vector<16x128xf32>
    %c0_60 = arith.constant 0 : index
    %c0_61 = arith.constant 0 : index
    %c0_62 = arith.constant 0 : index
    %60 = vector.load %arg6[%c0_60, %c0_61, %c0_62] : memref<1x16x128xf32, #tpu.memory_space<vmem>>, vector<1x16x128xf32>
    %61 = vector.shape_cast %60 : vector<1x16x128xf32> to vector<16x128xf32>
    %62 = vector.shape_cast %59 : vector<16x128xf32> to vector<1x16x128xf32>
    tpu.vector_store %arg6[%c0_60, %c0_61, %c0_62], %62 {strides = array<i32>} : memref<1x16x128xf32, #tpu.memory_space<vmem>>, vector<1x16x128xf32>,
    return
  }
  func.func @transform_0(%arg0: i32) -> (i32, i32, i32) {
    %c0_i32 = arith.constant 0 : i32
    %c0_i32_0 = arith.constant 0 : i32
    %c0_i32_1 = arith.constant 0 : i32
    return %arg0, %c0_i32, %c0_i32_0 : i32, i32, i32
  }
  func.func @transform_1(%arg0: i32) -> (i32, i32, i32) {
    %c0_i32 = arith.constant 0 : i32
    %c0_i32_0 = arith.constant 0 : i32
    %c0_i32_1 = arith.constant 0 : i32
    %c0_i32_2 = arith.constant 0 : i32
    return %c0_i32, %c0_i32_0, %c0_i32_1 : i32, i32, i32
  }
  func.func @transform_2(%arg0: i32) -> (i32, i32) {
    %c0_i32 = arith.constant 0 : i32
    %c0_i32_0 = arith.constant 0 : i32
    %c0_i32_1 = arith.constant 0 : i32
    return %c0_i32, %c0_i32_0 : i32, i32
  }
  func.func @transform_3(%arg0: i32) -> (i32, i32, i32) {
    %c0_i32 = arith.constant 0 : i32
    %c0_i32_0 = arith.constant 0 : i32
    %c0_i32_1 = arith.constant 0 : i32
    %c0_i32_2 = arith.constant 0 : i32
    return %c0_i32, %c0_i32_0, %c0_i32_1 : i32, i32, i32
  }
  func.func @transform_4(%arg0: i32) -> (i32, i32) {
    %c0_i32 = arith.constant 0 : i32
    %c0_i32_0 = arith.constant 0 : i32
    %c0_i32_1 = arith.constant 0 : i32
    return %c0_i32, %c0_i32_0 : i32, i32
  }
  func.func @transform_5(%arg0: i32) -> (i32, i32, i32) {
    %c0_i32 = arith.constant 0 : i32
    %c0_i32_0 = arith.constant 0 : i32
    %c0_i32_1 = arith.constant 0 : i32
    return %arg0, %c0_i32, %c0_i32_0 : i32, i32, i32
  }
}

</mosaic_0001>

<llo_original>
// kernel: tpu_custom_call.1
$region0: #{tpu_custom_call.1}
  #allocation0 [shape = 'u32[]', space=smem, size = 0x4, offset = 0x4, fixed_abs, tag = 'smem constant byte address 0x4 - core index']
  #allocation1 [shape = 'u32[72,128]{1,0:T(1,128)}', space=vmem, size = 0x9000, scoped, tag = 'internal scratch']
  #allocation2 [shape = 'f32[18,144]{1,0:T(8,128)}', space=vmem, size = 0x6000, scoped, tag = 'scratch operand']
  %s0 = inlined_call_operand.hbm [shape: f32[2,16,128], index: 0, kind: input, shape index: {}]
  %s1 = inlined_call_operand.hbm [shape: f32[3,144,128], index: 1, kind: input, shape index: {}]
  %s2 = inlined_call_operand.vmem [shape: f32[1,128], index: 2, kind: input, shape index: {}]
  %s3 = inlined_call_operand.hbm [shape: f32[3,144,128], index: 3, kind: input, shape index: {}]
  %s4 = inlined_call_operand.vmem [shape: f32[1,128], index: 4, kind: input, shape index: {}]
  %s5 = inlined_call_operand.hbm [shape: f32[2,16,128], index: 5, kind: output, shape index: {}]
  %s6 = sld [smem:[#allocation0]]
  $region65: #{tpu_custom_call.1} parent=0
    _
  %s8 = ssub.s32 1, %s6
  %s9 = scalar_select 0, %s8, %s6
  $region1: #{tpu_custom_call.1} parent=0
    #allocation3 [shape = 'u8[16384]{0}', space=vmem, size = 0x4000, scoped, tag = 'input window, operand 0']
    #allocation4 [shape = 's32[2]{0}', space=sflag, size = 0x8, scoped, tag = 'scoped memory for tpu_custom_call.1']
    #allocation5 [shape = 's32[2]{0}', space=sflag, size = 0x8, scoped, tag = 'scoped memory for tpu_custom_call.1']
    #allocation6 [shape = 'u8[221184]{0}', space=vmem, size = 0x36000, scoped, tag = 'input window, operand 1, single buffered']
    #allocation7 [shape = 's32[1]{0}', space=sflag, size = 0x4, scoped, tag = 'scoped memory for tpu_custom_call.1']
    #allocation8 [shape = 'u8[221184]{0}', space=vmem, size = 0x36000, scoped, tag = 'input window, operand 3, single buffered']
    #allocation9 [shape = 'u8[16384]{0}', space=vmem, size = 0x4000, scoped, tag = 'output window, operand 0']
    %10 = vsyncpa [#allocation4], 0
    %s11 = scalar_lea.sflag [#allocation4], 1
    %12 = vsyncpa %s11, 0
    %13 = vsyncpa [#allocation7], 0
    %14 = vsyncpa [#allocation5], 0
    %s15 = scalar_lea.sflag [#allocation5], 1
    %16 = vsyncpa %s15, 0
    loop: start=0, step=1, limit=4
    $region2: #{tpu_custom_call.1} parent=1 // loop_pre_header
      _
    $region3: #{tpu_custom_call.1} parent=1 // loop_header
      %s18 = sphi 0, %s22
      %p19 = scmp.ge.s32.totalorder %s18, 4
      %s28 = sphi 0, %s30
      %s31 = sphi 0, %s28
      %s32 = sphi 0, %s31
      %s48 = sphi 0, %s32
      %s52 = sphi 0, %s52
      %s54 = sphi 0, %s52
      %s55 = sphi 0, %s54
      %s69 = sphi 0, %s55
      %s73 = sphi 0, %s73
      %s75 = sphi 0, %s73
      %s76 = sphi 0, %s75
      %s90 = sphi 0, %s76
      %s94 = sphi 0, %s94
      %s96 = sphi 0, %s94
      %s97 = sphi 0, %s96
      %s111 = sphi 0, %s97
      %s115 = sphi 0, %s115
      %s117 = sphi 0, %s115
      %s118 = sphi 0, %s117
      %s132 = sphi 0, %s118
      %s138 = sphi 0, %s140
      %s141 = sphi 0, %s138
      %s142 = sphi 0, %s141
      %s158 = sphi 0, %s142
    $region4: #{tpu_custom_call.1} parent=1 // loop_header_branch
      %21 = sbr.rel (%p19) target = $region8
    $region5: #{tpu_custom_call.1} parent=1 // loop_body
      %s23 = ssub.s32 %s18, 1
      %s24 = ssub.s32 %s18, 2
      %s25 = sadd.s32 %s18, 1
      %s26 = ssub.s32 %s18, %s25
      %p27 = scmp.eq.s32.totalorder %s26, 0
      %s29 = sadd.s32 %s28, 1
      %s30 = scalar_select %p27, %s28, %s29
      %p33 = pneg %p27
      %p34 = scmp.eq.s32.totalorder %s18, 1
      %p35 = por %p33, %p34
      %p36 = scmp.ne.s32.totalorder %s28, %s31
      %p37 = scmp.eq.s32.totalorder %s18, 0
      %p38 = por %p36, %p37
      %p39 = scmp.ne.s32.totalorder %s28, %s31
      %p40 = scmp.eq.s32.totalorder %s23, 1
      %p41 = por %p39, %p40
      %p42 = scmp.ne.s32.totalorder %s31, %s32
      %p43 = scmp.eq.s32.totalorder %s23, 0
      %p44 = por %p42, %p43
      %p45 = scmp.ne.s32.totalorder %s31, %s32
      %p46 = scmp.eq.s32.totalorder %s24, 1
      %p47 = por %p45, %p46
      %p49 = scmp.ne.s32.totalorder %s32, %s48
      %p50 = scmp.eq.s32.totalorder %s24, 0
      %p51 = por %p49, %p50
      %s53 = sadd.s32 %s52, 1
      %p56 = scmp.eq.s32.totalorder %s18, 1
      %p57 = scmp.ne.s32.totalorder %s52, %s54
      %p58 = scmp.eq.s32.totalorder %s18, 0
      %p59 = por %p57, %p58
      %p60 = scmp.ne.s32.totalorder %s52, %s54
      %p61 = scmp.eq.s32.totalorder %s23, 1
      %p62 = por %p60, %p61
      %p63 = scmp.ne.s32.totalorder %s54, %s55
      %p64 = scmp.eq.s32.totalorder %s23, 0
      %p65 = por %p63, %p64
      %p66 = scmp.ne.s32.totalorder %s54, %s55
      %p67 = scmp.eq.s32.totalorder %s24, 1
      %p68 = por %p66, %p67
      %p70 = scmp.ne.s32.totalorder %s55, %s69
      %p71 = scmp.eq.s32.totalorder %s24, 0
      %p72 = por %p70, %p71
      %s74 = sadd.s32 %s73, 1
      %p77 = scmp.eq.s32.totalorder %s18, 1
      %p78 = scmp.ne.s32.totalorder %s73, %s75
      %p79 = scmp.eq.s32.totalorder %s18, 0
      %p80 = por %p78, %p79
      %p81 = scmp.ne.s32.totalorder %s73, %s75
      %p82 = scmp.eq.s32.totalorder %s23, 1
      %p83 = por %p81, %p82
      %p84 = scmp.ne.s32.totalorder %s75, %s76
      %p85 = scmp.eq.s32.totalorder %s23, 0
      %p86 = por %p84, %p85
      %p87 = scmp.ne.s32.totalorder %s75, %s76
      %p88 = scmp.eq.s32.totalorder %s24, 1
      %p89 = por %p87, %p88
      %p91 = scmp.ne.s32.totalorder %s76, %s90
      %p92 = scmp.eq.s32.totalorder %s24, 0
      %p93 = por %p91, %p92
      %s95 = sadd.s32 %s94, 1
      %p98 = scmp.eq.s32.totalorder %s18, 1
      %p99 = scmp.ne.s32.totalorder %s94, %s96
      %p100 = scmp.eq.s32.totalorder %s18, 0
      %p101 = por %p99, %p100
      %p102 = scmp.ne.s32.totalorder %s94, %s96
      %p103 = scmp.eq.s32.totalorder %s23, 1
      %p104 = por %p102, %p103
      %p105 = scmp.ne.s32.totalorder %s96, %s97
      %p106 = scmp.eq.s32.totalorder %s23, 0
      %p107 = por %p105, %p106
      %p108 = scmp.ne.s32.totalorder %s96, %s97
      %p109 = scmp.eq.s32.totalorder %s24, 1
      %p110 = por %p108, %p109
      %p112 = scmp.ne.s32.totalorder %s97, %s111
      %p113 = scmp.eq.s32.totalorder %s24, 0
      %p114 = por %p112, %p113
      %s116 = sadd.s32 %s115, 1
      %p119 = scmp.eq.s32.totalorder %s18, 1
      %p120 = scmp.ne.s32.totalorder %s115, %s117
      %p121 = scmp.eq.s32.totalorder %s18, 0
      %p122 = por %p120, %p121
      %p123 = scmp.ne.s32.totalorder %s115, %s117
      %p124 = scmp.eq.s32.totalorder %s23, 1
      %p125 = por %p123, %p124
      %p126 = scmp.ne.s32.totalorder %s117, %s118
      %p127 = scmp.eq.s32.totalorder %s23, 0
      %p128 = por %p126, %p127
      %p129 = scmp.ne.s32.totalorder %s117, %s118
      %p130 = scmp.eq.s32.totalorder %s24, 1
      %p131 = por %p129, %p130
      %p133 = scmp.ne.s32.totalorder %s118, %s132
      %p134 = scmp.eq.s32.totalorder %s24, 0
      %p135 = por %p133, %p134
      %s136 = ssub.s32 %s18, %s25
      %p137 = scmp.eq.s32.totalorder %s136, 0
      %s139 = sadd.s32 %s138, 1
      %s140 = scalar_select %p137, %s138, %s139
      %p143 = pneg %p137
      %p144 = scmp.eq.s32.totalorder %s18, 1
      %p145 = por %p143, %p144
      %p146 = scmp.ne.s32.totalorder %s138, %s141
      %p147 = scmp.eq.s32.totalorder %s18, 0
      %p148 = por %p146, %p147
      %p149 = scmp.ne.s32.totalorder %s138, %s141
      %p150 = scmp.eq.s32.totalorder %s23, 1
      %p151 = por %p149, %p150
      %p152 = scmp.ne.s32.totalorder %s141, %s142
      %p153 = scmp.eq.s32.totalorder %s23, 0
      %p154 = por %p152, %p153
      %p155 = scmp.ne.s32.totalorder %s141, %s142
      %p156 = scmp.eq.s32.totalorder %s24, 1
      %p157 = por %p155, %p156
      %p159 = scmp.ne.s32.totalorder %s142, %s158
      %p160 = scmp.eq.s32.totalorder %s24, 0
      %p161 = por %p159, %p160
      %p162 = scmp.le.s32.totalorder 1, %s18
      %p163 = scmp.lt.s32.totalorder %s18, 3
      %p164 = pnand %p162, %p163
      %p165 = pneg %p164
      // Predicated region
      $region9: #{tpu_custom_call.1} parent=5 // pred_check
        _
      $region10: #{tpu_custom_call.1} parent=5 // pred_check_branch
        %167 = sbr.rel (%p164) target = $region12
      $region11: #{tpu_custom_call.1} parent=5 // pred_region
        %s168 = ssub.s32 %s18, 1
        // Predicated region
        $region13: #{tpu_custom_call.1} parent=11 // pred_check
          %p169 = pneg %p65
        $region14: #{tpu_custom_call.1} parent=11 // pred_check_branch
          %171 = sbr.rel (%p169) target = $region16
        $region15: #{tpu_custom_call.1} parent=11 // pred_region
          %173 = vsyncadd [#allocation7], 0
          %s174 = sshll.u32 %s1, 4
          %s175 = int_to_ptr.hbm [resolvable:$true] %s174
          %s176 = sshll.u32 [#allocation6], 4
          %s177 = int_to_ptr.vmem [resolvable:$true] %s176
          %182 = dma.hbm_to_vmem [thread:$0]  %s175, 6912, %s177, [#allocation7], 128, 128, 8
        $region16: #{tpu_custom_call.1} parent=11 // pred_fallthru
          _
        // Predicated region
        $region17: #{tpu_custom_call.1} parent=11 // pred_check
          %p183 = pneg %p86
        $region18: #{tpu_custom_call.1} parent=11 // pred_check_branch
          %185 = sbr.rel (%p183) target = $region20
        $region19: #{tpu_custom_call.1} parent=11 // pred_region
          _
        $region20: #{tpu_custom_call.1} parent=11 // pred_fallthru
          _
        // Predicated region
        $region21: #{tpu_custom_call.1} parent=11 // pred_check
          %p186 = pneg %p107
        $region22: #{tpu_custom_call.1} parent=11 // pred_check_branch
          %188 = sbr.rel (%p186) target = $region24
        $region23: #{tpu_custom_call.1} parent=11 // pred_region
          %190 = vsyncadd [#allocation7], 0
          %s191 = sshll.u32 %s3, 4
          %s192 = int_to_ptr.hbm [resolvable:$true] %s191
          %s193 = sshll.u32 [#allocation8], 4
          %s194 = int_to_ptr.vmem [resolvable:$true] %s193
          %199 = dma.hbm_to_vmem [thread:$0]  %s192, 6912, %s194, [#allocation7], 128, 128, 8
        $region24: #{tpu_custom_call.1} parent=11 // pred_fallthru
          _
        // Predicated region
        $region25: #{tpu_custom_call.1} parent=11 // pred_check
          %p200 = pneg %p128
        $region26: #{tpu_custom_call.1} parent=11 // pred_check_branch
          %202 = sbr.rel (%p200) target = $region28
        $region27: #{tpu_custom_call.1} parent=11 // pred_region
          _
        $region28: #{tpu_custom_call.1} parent=11 // pred_fallthru
          _
      $region12: #{tpu_custom_call.1} parent=5 // pred_fallthru
        _
      %p203 = scmp.lt.s32.totalorder %s18, 2
      // Predicated region
      $region29: #{tpu_custom_call.1} parent=5 // pred_check
        %p204 = pneg %p203
      $region30: #{tpu_custom_call.1} parent=5 // pred_check_branch
        %206 = sbr.rel (%p204) target = $region32
      $region31: #{tpu_custom_call.1} parent=5 // pred_region
        // Predicated region
        $region33: #{tpu_custom_call.1} parent=31 // pred_check
          %p207 = pneg %p38
        $region34: #{tpu_custom_call.1} parent=31 // pred_check_branch
          %209 = sbr.rel (%p207) target = $region36
        $region35: #{tpu_custom_call.1} parent=31 // pred_region
          %s210 = sand.u32 %s28, 1
          %s211 = scalar_lea.sflag [#allocation4], %s210
          %s212 = sand.u32 %s28, 1
          %s213 = smul.addr %s212, 16
          %s214 = scalar_lea.vmem [#allocation3], %s213
          %216 = vsyncadd %s211, 0
          %s217 = smul.addr %s18, 2
          %s218 = smul.addr %s217, 8
          %s219 = scalar_lea.hbm %s0, %s218
          %s220 = sshll.u32 %s219, 4
          %s221 = int_to_ptr.hbm [resolvable:$true] %s220
          %s222 = sshll.u32 %s214, 4
          %s223 = int_to_ptr.vmem [resolvable:$true] %s222
          %228 = dma.hbm_to_vmem [thread:$0]  %s221, 256, %s223, %s211, 128, 128, 8
        $region36: #{tpu_custom_call.1} parent=31 // pred_fallthru
          _
      $region32: #{tpu_custom_call.1} parent=5 // pred_fallthru
        _
      %p229 = scmp.le.s32.totalorder 1, %s18
      %p230 = scmp.lt.s32.totalorder %s18, 3
      %p231 = pnand %p229, %p230
      %p232 = pneg %p231
      // Predicated region
      $region37: #{tpu_custom_call.1} parent=5 // pred_check
        _
      $region38: #{tpu_custom_call.1} parent=5 // pred_check_branch
        %234 = sbr.rel (%p231) target = $region40
      $region39: #{tpu_custom_call.1} parent=5 // pred_region
        %s235 = ssub.s32 %s18, 1
        %s236 = sand.u32 %s31, 1
        %s237 = scalar_lea.sflag [#allocation4], %s236
        %s238 = sand.u32 %s31, 1
        %s239 = smul.addr %s238, 16
        %s240 = scalar_lea.vmem [#allocation3], %s239
        // Predicated region
        $region41: #{tpu_custom_call.1} parent=39 // pred_check
          %p241 = pneg %p44
        $region42: #{tpu_custom_call.1} parent=39 // pred_check_branch
          %243 = sbr.rel (%p241) target = $region44
        $region43: #{tpu_custom_call.1} parent=39 // pred_region
          %245 = dma.done %s237, 256
        $region44: #{tpu_custom_call.1} parent=39 // pred_fallthru
          _
        // Predicated region
        $region45: #{tpu_custom_call.1} parent=39 // pred_check
          %p246 = pneg %p65
        $region46: #{tpu_custom_call.1} parent=39 // pred_check_branch
          %248 = sbr.rel (%p246) target = $region48
        $region47: #{tpu_custom_call.1} parent=39 // pred_region
          %250 = dma.done [#allocation7], 6912
        $region48: #{tpu_custom_call.1} parent=39 // pred_fallthru
          _
        // Predicated region
        $region49: #{tpu_custom_call.1} parent=39 // pred_check
          %p251 = pneg %p107
        $region50: #{tpu_custom_call.1} parent=39 // pred_check_branch
          %253 = sbr.rel (%p251) target = $region52
        $region51: #{tpu_custom_call.1} parent=39 // pred_region
          %255 = dma.done [#allocation7], 6912
        $region52: #{tpu_custom_call.1} parent=39 // pred_fallthru
          _
        %s256 = sand.u32 %s31, 1
        %s257 = scalar_lea.sflag [#allocation4], %s256
        %s258 = sand.u32 %s31, 1
        %s259 = smul.addr %s258, 16
        %s260 = scalar_lea.vmem [#allocation3], %s259
        %p261 = pneg %p44
        %p262 = pneg %p41
        %p263 = pneg %p65
        %p264 = pneg %p62
        %p265 = pneg %p86
        %p266 = pneg %p83
        %p267 = pneg %p107
        %p268 = pneg %p104
        %p269 = pneg %p128
        %p270 = pneg %p125
        %p271 = pneg %p154
        %p272 = pneg %p151
        %s273 = sand.u32 %s141, 1
        %s274 = scalar_lea.sflag [#allocation5], %s273
        %s275 = sand.u32 %s141, 1
        %s276 = smul.addr %s275, 16
        %s277 = scalar_lea.vmem [#allocation9], %s276
        %v278 = vlaneseq
        %vm279 = vcmp.ge.s32.totalorder %v278, 0
        %vm280 = vcmp.lt.s32.totalorder %v278, 144
        %vm281 = vmand %vm279, %vm280
        %282 = vst.msk [vmem:[#allocation2] ss:$8 sm:$0x3] %vm281, 0.0
        %283 = vst.msk [vmem:[#allocation2] ss:$8 sm:$0x0] %vm281, 0.0
        %s284 = scalar_lea.vmem [#allocation2], 33
        %285 = vst.msk [vmem:[%s284] ss:$8 sm:$0x3] %vm281, 0.0
        %286 = vst.msk [vmem:[%s284] ss:$8 sm:$0x0] %vm281, 0.0
        %vm287 = vcmask 64512
        %288 = vst.msk [vmem:[#allocation2] sm:$0xff] %vm287, 0.0
        %289 = vst.msk [vmem:[#allocation2 + $0x10] sm:$0xff] %vm287, 0.0
        %vm290 = vcmask 58368
        %291 = vst.msk [vmem:[#allocation2 + $0x20] sm:$0x3] %vm290, 0.0
        %vm292 = vcmask 130112
        %293 = vst.msk [vmem:[#allocation2 + $0x8] sm:$0xff] %vm292, 0.0
        %294 = vst.msk [vmem:[#allocation2 + $0x18] sm:$0xff] %vm292, 0.0
        %vm295 = vcmask 123968
        %296 = vst.msk [vmem:[#allocation2 + $0x28] sm:$0x3] %vm295, 0.0
        %v297 = vld [vmem:[%s240] sm:$0xff]
        %v298 = vld [vmem:[%s240 + $0x8] sm:$0xff]
        %vm301 = vcmask 1040384
        %v302 = vrot.slane %v297, 7
        %v303 = vrot.slane %v298, 7
        %v304 = vsel %vm301, %v302, %v303
        %305 = vrot.lane.b32.xlu0 %v302, 8
        %v306 = vpop.permute.xlu0 %305
        %307 = vrot.lane.b32.xlu0 %v304, 8
        %v308 = vpop.permute.xlu0 %307
        %309 = vrot.lane.b32.xlu0 %v303, 8
        %v310 = vpop.permute.xlu0 %309
        %vm314 = vcmask 1047617
        %315 = vst.msk [vmem:[#allocation2] sm:$0xfe] %vm314, %v306
        %vm316 = vcmask 64513
        %317 = vst.msk [vmem:[#allocation2 + $0x8] sm:$0xfe] %vm316, %v306
        %vm318 = vcmask 1047616
        %319 = vst.msk [vmem:[#allocation2 + $0x10] sm:$0xff] %vm318, %v308
        %320 = vst.msk [vmem:[#allocation2 + $0x18] sm:$0xff] %vm287, %v308
        %vm321 = vcmask 1040448
        %322 = vst.msk [vmem:[#allocation2 + $0x20] sm:$0x1] %vm321, %v310
        %vm323 = vcmask 57344
        %324 = vst.msk [vmem:[#allocation2 + $0x28] sm:$0x1] %vm323, %v310
        %v325 = vld [vmem:[#allocation2] sm:$0xff]
        %v326 = vld [vmem:[#allocation2 + $0x8] sm:$0xff]
        %v327 = vld [vmem:[#allocation2 + $0x10] sm:$0xff]
        %v328 = vld [vmem:[#allocation2 + $0x18] sm:$0xff]
        %v329 = vld [vmem:[#allocation6] sm:$0xff]
        %v330 = vld [vmem:[#allocation6 + $0x8] sm:$0xff]
        %v331 = vld [vmem:[#allocation6 + $0x10] sm:$0xff]
        %v332 = vld [vmem:[#allocation6 + $0x18] sm:$0xff]
        %v333 = vld [vmem:[#allocation6 + $0x20] sm:$0xff]
        %v334 = vld [vmem:[#allocation6 + $0x28] sm:$0xff]
        %v335 = vld [vmem:[#allocation6 + $0x30] sm:$0xff]
        %v336 = vld [vmem:[#allocation6 + $0x38] sm:$0xff]
        %v337 = vld [vmem:[#allocation6 + $0x40] sm:$0xff]
        %v338 = vld [vmem:[#allocation6 + $0x48] sm:$0xff]
        %v339 = vld [vmem:[#allocation6 + $0x50] sm:$0xff]
        %v340 = vld [vmem:[#allocation6 + $0x58] sm:$0xff]
        %v341 = vld [vmem:[#allocation6 + $0x60] sm:$0xff]
        %v342 = vld [vmem:[#allocation6 + $0x68] sm:$0xff]
        %v343 = vld [vmem:[#allocation6 + $0x70] sm:$0xff]
        %v344 = vld [vmem:[#allocation6 + $0x78] sm:$0xff]
        %v345 = vld [vmem:[#allocation6 + $0x80] sm:$0xff]
        %v346 = vld [vmem:[#allocation6 + $0x88] sm:$0xff]
        %v347 = vld [vmem:[#allocation2] sm:$0xfe]
        %v348 = vld [vmem:[#allocation2 + $0x8] sm:$0xfe]
        %v349 = vld [vmem:[#allocation2 + $0x20] sm:$0x1]
        %v350 = vld [vmem:[#allocation2 + $0x28] sm:$0x1]
        %s351 = scalar_lea.vmem [#allocation6], 144
        %v352 = vld [vmem:[%s351] sm:$0xff]
        %v353 = vld [vmem:[%s351 + $0x8] sm:$0xff]
        %v354 = vld [vmem:[%s351 + $0x10] sm:$0xff]
        %v355 = vld [vmem:[%s351 + $0x18] sm:$0xff]
        %v356 = vld [vmem:[%s351 + $0x20] sm:$0xff]
        %v357 = vld [vmem:[%s351 + $0x28] sm:$0xff]
        %v358 = vld [vmem:[%s351 + $0x30] sm:$0xff]
        %v359 = vld [vmem:[%s351 + $0x38] sm:$0xff]
        %v360 = vld [vmem:[%s351 + $0x40] sm:$0xff]
        %v361 = vld [vmem:[%s351 + $0x48] sm:$0xff]
        %v362 = vld [vmem:[%s351 + $0x50] sm:$0xff]
        %v363 = vld [vmem:[%s351 + $0x58] sm:$0xff]
        %v364 = vld [vmem:[%s351 + $0x60] sm:$0xff]
        %v365 = vld [vmem:[%s351 + $0x68] sm:$0xff]
        %v366 = vld [vmem:[%s351 + $0x70] sm:$0xff]
        %v367 = vld [vmem:[%s351 + $0x78] sm:$0xff]
        %v368 = vld [vmem:[%s351 + $0x80] sm:$0xff]
        %v369 = vld [vmem:[%s351 + $0x88] sm:$0xff]
        %vm376 = vcmask 1046528
        %v377 = vrot.slane %v347, 1
        %v378 = vrot.slane %v327, 1
        %v379 = vsel %vm376, %v377, %v378
        %v380 = vrot.slane %v348, 1
        %v381 = vrot.slane %v328, 1
        %v382 = vsel %vm376, %v380, %v381
        %v383 = vrot.slane %v349, 1
        %v384 = vsel %vm376, %v378, %v383
        %v385 = vrot.slane %v350, 1
        %v386 = vsel %vm376, %v381, %v385
        %vm389 = vcmask 130048
        %v390 = vsel %vm389, %v382, 0
        %v392 = vsel %vm389, %v386, 0
        %394 = vmatpush.msra.mxu0 %v367
        %395 = vmatpush.msra.mxu0 %v366
        %396 = vmatpush.msra.mxu0 %v365
        %397 = vmatpush.msra.mxu0 %v364
        %398 = vmatpush.msra.mxu0 %v363
        %399 = vmatpush.msra.mxu0 %v362
        %400 = vmatpush.msra.mxu0 %v361
        %401 = vmatpush.msra.mxu0 %v360
        %402 = vmatpush.msra.mxu0 %v359
        %403 = vmatpush.msra.mxu0 %v358
        %404 = vmatpush.msra.mxu0 %v357
        %405 = vmatpush.msra.mxu0 %v356
        %406 = vmatpush.msra.mxu0 %v355
        %407 = vmatpush.msra.mxu0 %v354
        %408 = vmatpush.msra.mxu0 %v353
        %409 = vmatpush.msra.mxu0 %v352
        %410 = vmatmul.f32.gmra.mxu0 %v379
        %v411 = vpop.f32.mrf.mxu0
        %v412 = vadd.f32 0.0, %v411
        %413 = vmatmul.f32.gmra.mxu0 %v384
        %v414 = vpop.f32.mrf.mxu0
        %v415 = vadd.f32 0.0, %v414
        %416 = vdwg.mxu0
        %417 = vmatpush.msra.mxu0 0.0
        %418 = vmatpush.msra.mxu0 0.0
        %419 = vmatpush.msra.mxu0 0.0
        %420 = vmatpush.msra.mxu0 0.0
        %421 = vmatpush.msra.mxu0 0.0
        %422 = vmatpush.msra.mxu0 0.0
        %423 = vmatpush.msra.mxu0 0.0
        %424 = vmatpush.msra.mxu0 0.0
        %425 = vmatpush.msra.mxu0 0.0
        %426 = vmatpush.msra.mxu0 0.0
        %427 = vmatpush.msra.mxu0 0.0
        %428 = vmatpush.msra.mxu0 0.0
        %429 = vmatpush.msra.mxu0 0.0
        %430 = vmatpush.msra.mxu0 0.0
        %431 = vmatpush.msra.mxu0 %v369
        %432 = vmatpush.msra.mxu0 %v368
        %433 = vmatmul.f32.gmra.mxu0 %v390
        %v434 = vpop.f32.mrf.mxu0
        %v435 = vadd.f32 %v412, %v434
        %436 = vmatmul.f32.gmra.mxu0 %v392
        %v437 = vpop.f32.mrf.mxu0
        %v438 = vadd.f32 %v415, %v437
        %439 = vdwg.mxu0
        %v441 = vsel %vm389, %v326, 0
        %v443 = vsel %vm389, %v328, 0
        %445 = vmatpush.msra.mxu0 %v344
        %446 = vmatpush.msra.mxu0 %v343
        %447 = vmatpush.msra.mxu0 %v342
        %448 = vmatpush.msra.mxu0 %v341
        %449 = vmatpush.msra.mxu0 %v340
        %450 = vmatpush.msra.mxu0 %v339
        %451 = vmatpush.msra.mxu0 %v338
        %452 = vmatpush.msra.mxu0 %v337
        %453 = vmatpush.msra.mxu0 %v336
        %454 = vmatpush.msra.mxu0 %v335
        %455 = vmatpush.msra.mxu0 %v334
        %456 = vmatpush.msra.mxu0 %v333
        %457 = vmatpush.msra.mxu0 %v332
        %458 = vmatpush.msra.mxu0 %v331
        %459 = vmatpush.msra.mxu0 %v330
        %460 = vmatpush.msra.mxu0 %v329
        %461 = vmatmul.f32.gmra.mxu0 %v325
        %v462 = vpop.f32.mrf.mxu0
        %v463 = vadd.f32 %v435, %v462
        %464 = vmatmul.f32.gmra.mxu0 %v327
        %v465 = vpop.f32.mrf.mxu0
        %v466 = vadd.f32 %v438, %v465
        %467 = vdwg.mxu0
        %468 = vmatpush.msra.mxu0 0.0
        %469 = vmatpush.msra.mxu0 0.0
        %470 = vmatpush.msra.mxu0 0.0
        %471 = vmatpush.msra.mxu0 0.0
        %472 = vmatpush.msra.mxu0 0.0
        %473 = vmatpush.msra.mxu0 0.0
        %474 = vmatpush.msra.mxu0 0.0
        %475 = vmatpush.msra.mxu0 0.0
        %476 = vmatpush.msra.mxu0 0.0
        %477 = vmatpush.msra.mxu0 0.0
        %478 = vmatpush.msra.mxu0 0.0
        %479 = vmatpush.msra.mxu0 0.0
        %480 = vmatpush.msra.mxu0 0.0
        %481 = vmatpush.msra.mxu0 0.0
        %482 = vmatpush.msra.mxu0 %v346
        %483 = vmatpush.msra.mxu0 %v345
        %484 = vmatmul.f32.gmra.mxu0 %v441
        %v485 = vpop.f32.mrf.mxu0
        %v486 = vadd.f32 %v463, %v485
        %487 = vmatmul.f32.gmra.mxu0 %v443
        %v488 = vpop.f32.mrf.mxu0
        %v489 = vadd.f32 %v466, %v488
        %490 = vdwg.mxu0
        %v491 = vld [vmem:[#allocation2] sm:$0xfc]
        %v492 = vld [vmem:[#allocation2 + $0x8] sm:$0xfc]
        %v493 = vld [vmem:[#allocation2 + $0x20] sm:$0x3]
        %v494 = vld [vmem:[#allocation2 + $0x28] sm:$0x3]
        %s495 = scalar_lea.vmem [#allocation6], 288
        %v496 = vld [vmem:[%s495] sm:$0xff]
        %v497 = vld [vmem:[%s495 + $0x8] sm:$0xff]
        %v498 = vld [vmem:[%s495 + $0x10] sm:$0xff]
        %v499 = vld [vmem:[%s495 + $0x18] sm:$0xff]
        %v500 = vld [vmem:[%s495 + $0x20] sm:$0xff]
        %v501 = vld [vmem:[%s495 + $0x28] sm:$0xff]
        %v502 = vld [vmem:[%s495 + $0x30] sm:$0xff]
        %v503 = vld [vmem:[%s495 + $0x38] sm:$0xff]
        %v504 = vld [vmem:[%s495 + $0x40] sm:$0xff]
        %v505 = vld [vmem:[%s495 + $0x48] sm:$0xff]
        %v506 = vld [vmem:[%s495 + $0x50] sm:$0xff]
        %v507 = vld [vmem:[%s495 + $0x58] sm:$0xff]
        %v508 = vld [vmem:[%s495 + $0x60] sm:$0xff]
        %v509 = vld [vmem:[%s495 + $0x68] sm:$0xff]
        %v510 = vld [vmem:[%s495 + $0x70] sm:$0xff]
        %v511 = vld [vmem:[%s495 + $0x78] sm:$0xff]
        %v512 = vld [vmem:[%s495 + $0x80] sm:$0xff]
        %v513 = vld [vmem:[%s495 + $0x88] sm:$0xff]
        %vm518 = vcmask 1045504
        %v519 = vrot.slane %v491, 2
        %v520 = vrot.slane %v327, 2
        %v521 = vsel %vm518, %v519, %v520
        %v522 = vrot.slane %v492, 2
        %v523 = vrot.slane %v328, 2
        %v524 = vsel %vm518, %v522, %v523
        %v525 = vrot.slane %v493, 2
        %v526 = vsel %vm518, %v520, %v525
        %v527 = vrot.slane %v494, 2
        %v528 = vsel %vm518, %v523, %v527
        %v531 = vsel %vm389, %v524, 0
        %v533 = vsel %vm389, %v528, 0
        %535 = vmatpush.msra.mxu0 %v511
        %536 = vmatpush.msra.mxu0 %v510
        %537 = vmatpush.msra.mxu0 %v509
        %538 = vmatpush.msra.mxu0 %v508
        %539 = vmatpush.msra.mxu0 %v507
        %540 = vmatpush.msra.mxu0 %v506
        %541 = vmatpush.msra.mxu0 %v505
        %542 = vmatpush.msra.mxu0 %v504
        %543 = vmatpush.msra.mxu0 %v503
        %544 = vmatpush.msra.mxu0 %v502
        %545 = vmatpush.msra.mxu0 %v501
        %546 = vmatpush.msra.mxu0 %v500
        %547 = vmatpush.msra.mxu0 %v499
        %548 = vmatpush.msra.mxu0 %v498
        %549 = vmatpush.msra.mxu0 %v497
        %550 = vmatpush.msra.mxu0 %v496
        %551 = vmatmul.f32.gmra.mxu0 %v521
        %v552 = vpop.f32.mrf.mxu0
        %v553 = vadd.f32 0.0, %v552
        %554 = vmatmul.f32.gmra.mxu0 %v526
        %v555 = vpop.f32.mrf.mxu0
        %v556 = vadd.f32 0.0, %v555
        %557 = vdwg.mxu0
        %558 = vmatpush.msra.mxu0 0.0
        %559 = vmatpush.msra.mxu0 0.0
        %560 = vmatpush.msra.mxu0 0.0
        %561 = vmatpush.msra.mxu0 0.0
        %562 = vmatpush.msra.mxu0 0.0
        %563 = vmatpush.msra.mxu0 0.0
        %564 = vmatpush.msra.mxu0 0.0
        %565 = vmatpush.msra.mxu0 0.0
        %566 = vmatpush.msra.mxu0 0.0
        %567 = vmatpush.msra.mxu0 0.0
        %568 = vmatpush.msra.mxu0 0.0
        %569 = vmatpush.msra.mxu0 0.0
        %570 = vmatpush.msra.mxu0 0.0
        %571 = vmatpush.msra.mxu0 0.0
        %572 = vmatpush.msra.mxu0 %v513
        %573 = vmatpush.msra.mxu0 %v512
        %574 = vmatmul.f32.gmra.mxu0 %v531
        %v575 = vpop.f32.mrf.mxu0
        %v576 = vadd.f32 %v553, %v575
        %577 = vmatmul.f32.gmra.mxu0 %v533
        %v578 = vpop.f32.mrf.mxu0
        %v579 = vadd.f32 %v556, %v578
        %580 = vdwg.mxu0
        %v581 = vadd.f32 %v486, %v576
        %v582 = vadd.f32 %v489, %v579
        %v583 = vld [vmem:[%s2] sm:$0x1]
        %v585 = vperm.slane %v583, 0
        %v587 = vadd.f32 %v581, %v585
        %v588 = vadd.f32 %v582, %v585
        %vm589 = vcmp.gt.f32.partialorder %v587, 0.0
        %vm590 = vcmp.gt.f32.partialorder %v588, 0.0
        %v591 = vmul.f32 %v587, 0.2
        %v592 = vmul.f32 %v588, 0.2
        %v593 = vsel %vm589, %v587, %v591
        %v594 = vsel %vm590, %v588, %v592
        %v597 = vrot.slane %v593, 7
        %v598 = vrot.slane %v594, 7
        %v599 = vsel %vm301, %v597, %v598
        %600 = vrot.lane.b32.xlu0 %v597, 8
        %v601 = vpop.permute.xlu0 %600
        %602 = vrot.lane.b32.xlu0 %v599, 8
        %v603 = vpop.permute.xlu0 %602
        %604 = vrot.lane.b32.xlu0 %v598, 8
        %v605 = vpop.permute.xlu0 %604
        %609 = vst.msk [vmem:[#allocation2] sm:$0xfe] %vm314, %v601
        %610 = vst.msk [vmem:[#allocation2 + $0x8] sm:$0xfe] %vm316, %v601
        %611 = vst.msk [vmem:[#allocation2 + $0x10] sm:$0xff] %vm318, %v603
        %612 = vst.msk [vmem:[#allocation2 + $0x18] sm:$0xff] %vm287, %v603
        %613 = vst.msk [vmem:[#allocation2 + $0x20] sm:$0x1] %vm321, %v605
        %614 = vst.msk [vmem:[#allocation2 + $0x28] sm:$0x1] %vm323, %v605
        %v615 = vld [vmem:[#allocation2] sm:$0xff]
        %v616 = vld [vmem:[#allocation2 + $0x8] sm:$0xff]
        %v617 = vld [vmem:[#allocation2 + $0x10] sm:$0xff]
        %v618 = vld [vmem:[#allocation2 + $0x18] sm:$0xff]
        %v619 = vld [vmem:[#allocation8] sm:$0xff]
        %v620 = vld [vmem:[#allocation8 + $0x8] sm:$0xff]
        %v621 = vld [vmem:[#allocation8 + $0x10] sm:$0xff]
        %v622 = vld [vmem:[#allocation8 + $0x18] sm:$0xff]
        %v623 = vld [vmem:[#allocation8 + $0x20] sm:$0xff]
        %v624 = vld [vmem:[#allocation8 + $0x28] sm:$0xff]
        %v625 = vld [vmem:[#allocation8 + $0x30] sm:$0xff]
        %v626 = vld [vmem:[#allocation8 + $0x38] sm:$0xff]
        %v627 = vld [vmem:[#allocation8 + $0x40] sm:$0xff]
        %v628 = vld [vmem:[#allocation8 + $0x48] sm:$0xff]
        %v629 = vld [vmem:[#allocation8 + $0x50] sm:$0xff]
        %v630 = vld [vmem:[#allocation8 + $0x58] sm:$0xff]
        %v631 = vld [vmem:[#allocation8 + $0x60] sm:$0xff]
        %v632 = vld [vmem:[#allocation8 + $0x68] sm:$0xff]
        %v633 = vld [vmem:[#allocation8 + $0x70] sm:$0xff]
        %v634 = vld [vmem:[#allocation8 + $0x78] sm:$0xff]
        %v635 = vld [vmem:[#allocation8 + $0x80] sm:$0xff]
        %v636 = vld [vmem:[#allocation8 + $0x88] sm:$0xff]
        %v637 = vld [vmem:[#allocation2] sm:$0xfe]
        %v638 = vld [vmem:[#allocation2 + $0x8] sm:$0xfe]
        %v639 = vld [vmem:[#allocation2 + $0x20] sm:$0x1]
        %v640 = vld [vmem:[#allocation2 + $0x28] sm:$0x1]
        %s641 = scalar_lea.vmem [#allocation8], 144
        %v642 = vld [vmem:[%s641] sm:$0xff]
        %v643 = vld [vmem:[%s641 + $0x8] sm:$0xff]
        %v644 = vld [vmem:[%s641 + $0x10] sm:$0xff]
        %v645 = vld [vmem:[%s641 + $0x18] sm:$0xff]
        %v646 = vld [vmem:[%s641 + $0x20] sm:$0xff]
        %v647 = vld [vmem:[%s641 + $0x28] sm:$0xff]
        %v648 = vld [vmem:[%s641 + $0x30] sm:$0xff]
        %v649 = vld [vmem:[%s641 + $0x38] sm:$0xff]
        %v650 = vld [vmem:[%s641 + $0x40] sm:$0xff]
        %v651 = vld [vmem:[%s641 + $0x48] sm:$0xff]
        %v652 = vld [vmem:[%s641 + $0x50] sm:$0xff]
        %v653 = vld [vmem:[%s641 + $0x58] sm:$0xff]
        %v654 = vld [vmem:[%s641 + $0x60] sm:$0xff]
        %v655 = vld [vmem:[%s641 + $0x68] sm:$0xff]
        %v656 = vld [vmem:[%s641 + $0x70] sm:$0xff]
        %v657 = vld [vmem:[%s641 + $0x78] sm:$0xff]
        %v658 = vld [vmem:[%s641 + $0x80] sm:$0xff]
        %v659 = vld [vmem:[%s641 + $0x88] sm:$0xff]
        %v666 = vrot.slane %v637, 1
        %v667 = vrot.slane %v617, 1
        %v668 = vsel %vm376, %v666, %v667
        %v669 = vrot.slane %v638, 1
        %v670 = vrot.slane %v618, 1
        %v671 = vsel %vm376, %v669, %v670
        %v672 = vrot.slane %v639, 1
        %v673 = vsel %vm376, %v667, %v672
        %v674 = vrot.slane %v640, 1
        %v675 = vsel %vm376, %v670, %v674
        %v678 = vsel %vm389, %v671, 0
        %v680 = vsel %vm389, %v675, 0
        %682 = vmatpush.msra.mxu0 %v657
        %683 = vmatpush.msra.mxu0 %v656
        %684 = vmatpush.msra.mxu0 %v655
        %685 = vmatpush.msra.mxu0 %v654
        %686 = vmatpush.msra.mxu0 %v653
        %687 = vmatpush.msra.mxu0 %v652
        %688 = vmatpush.msra.mxu0 %v651
        %689 = vmatpush.msra.mxu0 %v650
        %690 = vmatpush.msra.mxu0 %v649
        %691 = vmatpush.msra.mxu0 %v648
        %692 = vmatpush.msra.mxu0 %v647
        %693 = vmatpush.msra.mxu0 %v646
        %694 = vmatpush.msra.mxu0 %v645
        %695 = vmatpush.msra.mxu0 %v644
        %696 = vmatpush.msra.mxu0 %v643
        %697 = vmatpush.msra.mxu0 %v642
        %698 = vmatmul.f32.gmra.mxu0 %v668
        %v699 = vpop.f32.mrf.mxu0
        %v700 = vadd.f32 0.0, %v699
        %701 = vmatmul.f32.gmra.mxu0 %v673
        %v702 = vpop.f32.mrf.mxu0
        %v703 = vadd.f32 0.0, %v702
        %704 = vdwg.mxu0
        %705 = vmatpush.msra.mxu0 0.0
        %706 = vmatpush.msra.mxu0 0.0
        %707 = vmatpush.msra.mxu0 0.0
        %708 = vmatpush.msra.mxu0 0.0
        %709 = vmatpush.msra.mxu0 0.0
        %710 = vmatpush.msra.mxu0 0.0
        %711 = vmatpush.msra.mxu0 0.0
        %712 = vmatpush.msra.mxu0 0.0
        %713 = vmatpush.msra.mxu0 0.0
        %714 = vmatpush.msra.mxu0 0.0
        %715 = vmatpush.msra.mxu0 0.0
        %716 = vmatpush.msra.mxu0 0.0
        %717 = vmatpush.msra.mxu0 0.0
        %718 = vmatpush.msra.mxu0 0.0
        %719 = vmatpush.msra.mxu0 %v659
        %720 = vmatpush.msra.mxu0 %v658
        %721 = vmatmul.f32.gmra.mxu0 %v678
        %v722 = vpop.f32.mrf.mxu0
        %v723 = vadd.f32 %v700, %v722
        %724 = vmatmul.f32.gmra.mxu0 %v680
        %v725 = vpop.f32.mrf.mxu0
        %v726 = vadd.f32 %v703, %v725
        %727 = vdwg.mxu0
        %v729 = vsel %vm389, %v616, 0
        %v731 = vsel %vm389, %v618, 0
        %733 = vmatpush.msra.mxu0 %v634
        %734 = vmatpush.msra.mxu0 %v633
        %735 = vmatpush.msra.mxu0 %v632
        %736 = vmatpush.msra.mxu0 %v631
        %737 = vmatpush.msra.mxu0 %v630
        %738 = vmatpush.msra.mxu0 %v629
        %739 = vmatpush.msra.mxu0 %v628
        %740 = vmatpush.msra.mxu0 %v627
        %741 = vmatpush.msra.mxu0 %v626
        %742 = vmatpush.msra.mxu0 %v625
        %743 = vmatpush.msra.mxu0 %v624
        %744 = vmatpush.msra.mxu0 %v623
        %745 = vmatpush.msra.mxu0 %v622
        %746 = vmatpush.msra.mxu0 %v621
        %747 = vmatpush.msra.mxu0 %v620
        %748 = vmatpush.msra.mxu0 %v619
        %749 = vmatmul.f32.gmra.mxu0 %v615
        %v750 = vpop.f32.mrf.mxu0
        %v751 = vadd.f32 %v723, %v750
        %752 = vmatmul.f32.gmra.mxu0 %v617
        %v753 = vpop.f32.mrf.mxu0
        %v754 = vadd.f32 %v726, %v753
        %755 = vdwg.mxu0
        %756 = vmatpush.msra.mxu0 0.0
        %757 = vmatpush.msra.mxu0 0.0
        %758 = vmatpush.msra.mxu0 0.0
        %759 = vmatpush.msra.mxu0 0.0
        %760 = vmatpush.msra.mxu0 0.0
        %761 = vmatpush.msra.mxu0 0.0
        %762 = vmatpush.msra.mxu0 0.0
        %763 = vmatpush.msra.mxu0 0.0
        %764 = vmatpush.msra.mxu0 0.0
        %765 = vmatpush.msra.mxu0 0.0
        %766 = vmatpush.msra.mxu0 0.0
        %767 = vmatpush.msra.mxu0 0.0
        %768 = vmatpush.msra.mxu0 0.0
        %769 = vmatpush.msra.mxu0 0.0
        %770 = vmatpush.msra.mxu0 %v636
        %771 = vmatpush.msra.mxu0 %v635
        %772 = vmatmul.f32.gmra.mxu0 %v729
        %v773 = vpop.f32.mrf.mxu0
        %v774 = vadd.f32 %v751, %v773
        %775 = vmatmul.f32.gmra.mxu0 %v731
        %v776 = vpop.f32.mrf.mxu0
        %v777 = vadd.f32 %v754, %v776
        %778 = vdwg.mxu0
        %v779 = vld [vmem:[#allocation2] sm:$0xfc]
        %v780 = vld [vmem:[#allocation2 + $0x8] sm:$0xfc]
        %v781 = vld [vmem:[#allocation2 + $0x20] sm:$0x3]
        %v782 = vld [vmem:[#allocation2 + $0x28] sm:$0x3]
        %s783 = scalar_lea.vmem [#allocation8], 288
        %v784 = vld [vmem:[%s783] sm:$0xff]
        %v785 = vld [vmem:[%s783 + $0x8] sm:$0xff]
        %v786 = vld [vmem:[%s783 + $0x10] sm:$0xff]
        %v787 = vld [vmem:[%s783 + $0x18] sm:$0xff]
        %v788 = vld [vmem:[%s783 + $0x20] sm:$0xff]
        %v789 = vld [vmem:[%s783 + $0x28] sm:$0xff]
        %v790 = vld [vmem:[%s783 + $0x30] sm:$0xff]
        %v791 = vld [vmem:[%s783 + $0x38] sm:$0xff]
        %v792 = vld [vmem:[%s783 + $0x40] sm:$0xff]
        %v793 = vld [vmem:[%s783 + $0x48] sm:$0xff]
        %v794 = vld [vmem:[%s783 + $0x50] sm:$0xff]
        %v795 = vld [vmem:[%s783 + $0x58] sm:$0xff]
        %v796 = vld [vmem:[%s783 + $0x60] sm:$0xff]
        %v797 = vld [vmem:[%s783 + $0x68] sm:$0xff]
        %v798 = vld [vmem:[%s783 + $0x70] sm:$0xff]
        %v799 = vld [vmem:[%s783 + $0x78] sm:$0xff]
        %v800 = vld [vmem:[%s783 + $0x80] sm:$0xff]
        %v801 = vld [vmem:[%s783 + $0x88] sm:$0xff]
        %v806 = vrot.slane %v779, 2
        %v807 = vrot.slane %v617, 2
        %v808 = vsel %vm518, %v806, %v807
        %v809 = vrot.slane %v780, 2
        %v810 = vrot.slane %v618, 2
        %v811 = vsel %vm518, %v809, %v810
        %v812 = vrot.slane %v781, 2
        %v813 = vsel %vm518, %v807, %v812
        %v814 = vrot.slane %v782, 2
        %v815 = vsel %vm518, %v810, %v814
        %v818 = vsel %vm389, %v811, 0
        %v820 = vsel %vm389, %v815, 0
        %822 = vmatpush.msra.mxu0 %v799
        %823 = vmatpush.msra.mxu0 %v798
        %824 = vmatpush.msra.mxu0 %v797
        %825 = vmatpush.msra.mxu0 %v796
        %826 = vmatpush.msra.mxu0 %v795
        %827 = vmatpush.msra.mxu0 %v794
        %828 = vmatpush.msra.mxu0 %v793
        %829 = vmatpush.msra.mxu0 %v792
        %830 = vmatpush.msra.mxu0 %v791
        %831 = vmatpush.msra.mxu0 %v790
        %832 = vmatpush.msra.mxu0 %v789
        %833 = vmatpush.msra.mxu0 %v788
        %834 = vmatpush.msra.mxu0 %v787
        %835 = vmatpush.msra.mxu0 %v786
        %836 = vmatpush.msra.mxu0 %v785
        %837 = vmatpush.msra.mxu0 %v784
        %838 = vmatmul.f32.gmra.mxu0 %v808
        %v839 = vpop.f32.mrf.mxu0
        %v840 = vadd.f32 0.0, %v839
        %841 = vmatmul.f32.gmra.mxu0 %v813
        %v842 = vpop.f32.mrf.mxu0
        %v843 = vadd.f32 0.0, %v842
        %844 = vdwg.mxu0
        %845 = vmatpush.msra.mxu0 0.0
        %846 = vmatpush.msra.mxu0 0.0
        %847 = vmatpush.msra.mxu0 0.0
        %848 = vmatpush.msra.mxu0 0.0
        %849 = vmatpush.msra.mxu0 0.0
        %850 = vmatpush.msra.mxu0 0.0
        %851 = vmatpush.msra.mxu0 0.0
        %852 = vmatpush.msra.mxu0 0.0
        %853 = vmatpush.msra.mxu0 0.0
        %854 = vmatpush.msra.mxu0 0.0
        %855 = vmatpush.msra.mxu0 0.0
        %856 = vmatpush.msra.mxu0 0.0
        %857 = vmatpush.msra.mxu0 0.0
        %858 = vmatpush.msra.mxu0 0.0
        %859 = vmatpush.msra.mxu0 %v801
        %860 = vmatpush.msra.mxu0 %v800
        %861 = vmatmul.f32.gmra.mxu0 %v818
        %v862 = vpop.f32.mrf.mxu0
        %v863 = vadd.f32 %v840, %v862
        %864 = vmatmul.f32.gmra.mxu0 %v820
        %v865 = vpop.f32.mrf.mxu0
        %v866 = vadd.f32 %v843, %v865
        %867 = vdwg.mxu0
        %v868 = vadd.f32 %v774, %v863
        %v869 = vadd.f32 %v777, %v866
        %v870 = vld [vmem:[%s4] sm:$0x1]
        %v872 = vperm.slane %v870, 0
        %v874 = vadd.f32 %v868, %v872
        %v875 = vadd.f32 %v869, %v872
        %v876 = vmul.f32 %v874, 0.1
        %v877 = vmul.f32 %v875, 0.1
        %v878 = vld [vmem:[%s240] sm:$0xff]
        %v879 = vld [vmem:[%s240 + $0x8] sm:$0xff]
        %v880 = vadd.f32 %v876, %v878
        %v881 = vadd.f32 %v877, %v879
        %882 = vst [vmem:[%s277] sm:$0xff] %v880
        %883 = vst [vmem:[%s277 + $0x8] sm:$0xff] %v881
        %s884 = sand.u32 %s141, 1
        %s885 = scalar_lea.sflag [#allocation5], %s884
        %s886 = sand.u32 %s141, 1
        %s887 = smul.addr %s886, 16
        %s888 = scalar_lea.vmem [#allocation9], %s887
        // Predicated region
        $region53: #{tpu_custom_call.1} parent=39 // pred_check
          %p889 = pneg %p151
        $region54: #{tpu_custom_call.1} parent=39 // pred_check_branch
          %891 = sbr.rel (%p889) target = $region56
        $region55: #{tpu_custom_call.1} parent=39 // pred_region
          %893 = vsyncadd %s885, 0
          %s894 = smul.addr %s23, 2
          %s895 = smul.addr %s894, 8
          %s896 = scalar_lea.hbm %s5, %s895
          %s897 = sshll.u32 %s888, 4
          %s898 = int_to_ptr.vmem [resolvable:$true] %s897
          %s899 = sshll.u32 %s896, 4
          %s900 = int_to_ptr.hbm [resolvable:$true] %s899
          %905 = dma.vmem_to_hbm [thread:$0]  %s898, 256, %s900, %s885, 128, 128, 8
        $region56: #{tpu_custom_call.1} parent=39 // pred_fallthru
          _
      $region40: #{tpu_custom_call.1} parent=5 // pred_fallthru
        _
      %p906 = scmp.le.s32.totalorder 2, %s18
      // Predicated region
      $region57: #{tpu_custom_call.1} parent=5 // pred_check
        %p907 = pneg %p906
      $region58: #{tpu_custom_call.1} parent=5 // pred_check_branch
        %909 = sbr.rel (%p907) target = $region60
      $region59: #{tpu_custom_call.1} parent=5 // pred_region
        %s910 = ssub.s32 %s18, 2
        // Predicated region
        $region61: #{tpu_custom_call.1} parent=59 // pred_check
          %p911 = pneg %p157
        $region62: #{tpu_custom_call.1} parent=59 // pred_check_branch
          %913 = sbr.rel (%p911) target = $region64
        $region63: #{tpu_custom_call.1} parent=59 // pred_region
          %s914 = sand.u32 %s142, 1
          %s915 = scalar_lea.sflag [#allocation5], %s914
          %s916 = sand.u32 %s142, 1
          %s917 = smul.addr %s916, 16
          %s918 = scalar_lea.vmem [#allocation9], %s917
          %920 = dma.done %s915, 256
        $region64: #{tpu_custom_call.1} parent=59 // pred_fallthru
          _
      $region60: #{tpu_custom_call.1} parent=5 // pred_fallthru
        _
    $region6: #{tpu_custom_call.1} parent=1 // loop_footer
      %s22 = sadd.s32 1, %s18
    $region7: #{tpu_custom_call.1} parent=1 // loop_footer_branch
      %17 = sbr.rel target = $region3
    $region8: #{tpu_custom_call.1} parent=1 // loop_exit
      _
    %921 = vsyncpa [#allocation4], 1
    %s922 = scalar_lea.sflag [#allocation4], 1
    %923 = vsyncpa %s922, 1
    %924 = vsyncpa [#allocation7], 1
    %925 = vsyncpa [#allocation5], 1
    %s926 = scalar_lea.sflag [#allocation5], 1
    %927 = vsyncpa %s926, 1

</llo_original>
